<compile_context>
chip_gen: v5e
topology: v5e:2x2
jax: 0.10.0
libtpu: 0.0.40
codegen_flags: <defaults>
</compile_context>

<pallas_src>
import functools

import jax
import jax.numpy as jnp
from jax.experimental import pallas as pl
from jax.experimental.pallas import tpu as pltpu


_LANES = 512  # lane-dense columns (multiple of 128 => full, unmasked vector stores)


def _round_up(a, m):
    return ((a + m - 1) // m) * m


def _general_relu_kernel(x_ref, o_ref, *, leak, sub, maxv):
    x = x_ref[...]
    if leak is not None:
        # leaky_relu with a static negative slope (folds into a VPU immediate).
        y = jnp.where(x >= 0, x, x * jnp.asarray(leak, dtype=x.dtype))
    else:
        y = jnp.maximum(x, jnp.zeros((), dtype=x.dtype))
    if sub is not None:
        y = y - jnp.asarray(sub, dtype=x.dtype)
    if maxv is not None:
        y = jnp.minimum(y, jnp.asarray(maxv, dtype=x.dtype))
    o_ref[...] = y


def _jnp_general_relu(x, leak, sub, maxv):
    """Plain-jnp fallback (small tensors / ragged tail) — lets XLA fuse it."""
    y = jnp.where(x >= 0, x, x * leak) if leak is not None else jnp.maximum(x, 0)
    if sub is not None:
        y = y - sub
    if maxv is not None:
        y = jnp.minimum(y, maxv)
    return y.astype(x.dtype)


def _tiling_config(itemsize):
    """Per-TPU-generation (tile_rows, vmem_limit_bytes, ensure_two_tiles)."""
    kind = ""
    try:
        kind = jax.devices()[0].device_kind.lower()
    except Exception:  # no devices visible at trace time — use conservative defaults
        pass
    if "7" in kind:
        # v7x: 64 MiB VMEM/TC, 2 TCs/chip, 3.2 TB/s HBM.
        tile_bytes, vmem_limit, two_tiles = 4 << 20, None, True
    elif ("v6" in kind) or ("v5" in kind) or ("v4" in kind):
        # 128 MiB-VMEM generations: bigger tiles + explicit scoped-VMEM raise.
        tile_bytes, vmem_limit, two_tiles = 8 << 20, 64 << 20, False
    else:
        # Unknown / older: stay within any default scoped VMEM limit.
        tile_bytes, vmem_limit, two_tiles = 2 << 20, None, False
    tile_rows = max(8, (tile_bytes // (_LANES * itemsize)) // 8 * 8)
    return tile_rows, vmem_limit, two_tiles


def _general_relu_2d(x2d, leak, sub, maxv):
    """Run the elementwise kernel over a lane-dense (rows, _LANES) slab."""
    rows, lanes = x2d.shape
    tile_rows, vmem_limit, two_tiles = _tiling_config(x2d.dtype.itemsize)
    if two_tiles and rows > 8:
        # Guarantee >= 2 row tiles so both v7x TensorCores get work.
        tile_rows = min(tile_rows, _round_up(pl.cdiv(rows, 2), 8))
    # Final tile_rows is either a multiple of 8 or equal to the full row extent
    # (both satisfy the (8, 128) block constraint); partial last blocks are
    # masked by Pallas.
    tile_rows = min(tile_rows, rows)

    kernel = functools.partial(_general_relu_kernel, leak=leak, sub=sub, maxv=maxv)
    return pl.pallas_call(
        kernel,
        out_shape=jax.ShapeDtypeStruct((rows, lanes), x2d.dtype),
        grid=(pl.cdiv(rows, tile_rows),),
        in_specs=[pl.BlockSpec((tile_rows, lanes), lambda i: (i, 0))],
        out_specs=pl.BlockSpec((tile_rows, lanes), lambda i: (i, 0)),
        compiler_params=pltpu.CompilerParams(
            dimension_semantics=("parallel",),
            vmem_limit_bytes=vmem_limit,
        ),
    )(x2d)


def general_relu(x, leak=None, sub=None, maxv=None, *, min_pallas_elems=262144):
    """Pallas TPU implementation of GeneralRelu.forward (functional, not in-place).

    Tensors with fewer than `min_pallas_elems` elements use plain jnp so XLA can
    fuse the op into its producer/consumer (a standalone pallas_call has fixed
    launch/pipeline overhead that dwarfs tiny HBM traffic).
    """
    orig_shape = x.shape
    n = x.size
    rows = n // _LANES

    if n < min_pallas_elems or rows == 0:
        return _jnp_general_relu(x, leak, sub, maxv)

    xf = x.reshape(-1)  # contiguous flatten: free bitcast
    n_main = rows * _LANES

    if n_main == n:
        # Lane-aligned: pure Pallas path, no pad / slice round trips.
        out2d = _general_relu_2d(xf.reshape(rows, _LANES), leak, sub, maxv)
        return out2d.reshape(orig_shape)

    # Ragged: Pallas on the 512-aligned prefix, plain jnp on the <512-elem tail.
    out_main = _general_relu_2d(
        xf[:n_main].reshape(rows, _LANES), leak, sub, maxv
    ).reshape(-1)
    out_tail = _jnp_general_relu(xf[n_main:], leak, sub, maxv)
    return jnp.concatenate([out_main, out_tail]).reshape(orig_shape)


def _ref_general_relu(x, leak=None, sub=None, maxv=None):
    y = jnp.where(x >= 0, x, x * jnp.asarray(leak, x.dtype)) if leak is not None \
        else jnp.maximum(x, jnp.zeros((), x.dtype))
    if sub is not None:
        y = y - jnp.asarray(sub, x.dtype)
    if maxv is not None:
        y = jnp.minimum(y, jnp.asarray(maxv, x.dtype))
    return y


if __name__ == "__main__":
    key = jax.random.PRNGKey(0)
    leak, sub, maxv = 0.1, 0.4, 6.0
    k0, k1, k2, k3 = jax.random.split(key, 4)

    # 1) Small NCHW activation (matches PyTorch module usage): (2, 4, 16, 16).
    #    Default threshold -> fused jnp fallback path.
    x = jax.random.normal(k0, (2, 4, 16, 16), dtype=jnp.float32)
    ref = _ref_general_relu(x, leak, sub, maxv)
    out = jax.block_until_ready(general_relu(x, leak=leak, sub=sub, maxv=maxv))
    assert out.shape == x.shape and out.dtype == x.dtype
    assert jnp.allclose(out, ref, atol=1e-6), "mismatch (small f32, fallback)"

    #    Same tensor forced through the Pallas path (lane-aligned, single block).
    out_p = jax.block_until_ready(
        general_relu(x, leak=leak, sub=sub, maxv=maxv, min_pallas_elems=0))
    assert jnp.allclose(out_p, ref, atol=1e-6), "mismatch (small f32, pallas)"

    #    Default params => plain relu path.
    out_relu = jax.block_until_ready(general_relu(x, min_pallas_elems=0))
    assert jnp.allclose(out_relu, jnp.maximum(x, 0.0), atol=1e-6)

    # 2) Larger activation exercising multiple grid steps + a partial last block
    #    on every generation's tile size: (2, 96, 128, 128) = 3,145,728 elements.
    xl = jax.random.normal(k1, (2, 96, 128, 128), dtype=jnp.float32)
    outl = jax.block_until_ready(general_relu(xl, leak=leak, sub=sub, maxv=maxv))
    refl = _ref_general_relu(xl, leak, sub, maxv)
    assert jnp.allclose(outl, refl, atol=1e-6), "mismatch (large f32)"

    # 3) Tiny ragged bf16 tensor -> jnp fallback (math stays in bf16).
    xb = jax.random.normal(k2, (3, 5, 7, 9), dtype=jnp.bfloat16)
    outb = jax.block_until_ready(general_relu(xb, leak=leak, sub=sub, maxv=maxv))
    refb = _ref_general_relu(xb, leak, sub, maxv)
    assert outb.dtype == jnp.bfloat16
    assert jnp.allclose(outb.astype(jnp.float32), refb.astype(jnp.float32),
                        atol=1e-2), "mismatch (ragged bf16 fallback)"

    # 4) Ragged f32 forced through the Pallas prefix + jnp tail path.
    xr = jax.random.normal(k3, (300, 701), dtype=jnp.float32)  # 210300 % 512 != 0
    outr = jax.block_until_ready(
        general_relu(xr, leak=leak, sub=sub, maxv=maxv, min_pallas_elems=0))
    refr = _ref_general_relu(xr, leak, sub, maxv)
    assert outr.shape == xr.shape and outr.dtype == xr.dtype
    assert jnp.allclose(outr, refr, atol=1e-6), "mismatch (ragged f32, pallas prefix)"

    print("KERNEL_OK")
</pallas_src>

<mosaic_0001>
module attributes {stable_mosaic.version = 11 : i64} {
  func.func @_general_relu_kernel(%arg0: i32, %arg1: memref<4x512xf32, #tpu.memory_space<vmem>>, %arg2: memref<4x512xf32, #tpu.memory_space<vmem>>) attributes {dimension_semantics = [#tpu.dimension_semantics<parallel>], iteration_bounds = array<i64: 1>, scalar_prefetch = 0 : i64, scratch_operands = 0 : i64, tpu.core_type = #tpu.core_type<tc>, window_params = [{transform_indices = @transform_0, window_bounds = array<i64: 4, 512>}, {transform_indices = @transform_1, window_bounds = array<i64: 4, 512>}]} {
    %c0 = arith.constant 0 : index
    %c0_0 = arith.constant 0 : index
    %0 = vector.load %arg1[%c0, %c0_0] : memref<4x512xf32, #tpu.memory_space<vmem>>, vector<4x512xf32>
    %cst = arith.constant 0.000000e+00 : f32
    %1 = vector.broadcast %cst : f32 to vector<4x512xf32>
    %2 = arith.cmpf oge, %0, %1 : vector<4x512xf32>
    %cst_1 = arith.constant 1.000000e-01 : f32
    %3 = vector.broadcast %cst_1 : f32 to vector<4x512xf32>
    %4 = arith.mulf %0, %3 : vector<4x512xf32>
    %5 = arith.select %2, %0, %4 : vector<4x512xi1>, vector<4x512xf32>
    %cst_2 = arith.constant 4.000000e-01 : f32
    %6 = vector.broadcast %cst_2 : f32 to vector<4x512xf32>
    %7 = arith.subf %5, %6 : vector<4x512xf32>
    %cst_3 = arith.constant 6.000000e+00 : f32
    %8 = vector.broadcast %cst_3 : f32 to vector<4x512xf32>
    %9 = arith.minimumf %7, %8 : vector<4x512xf32>
    %c0_4 = arith.constant 0 : index
    %c0_5 = arith.constant 0 : index
    %10 = vector.load %arg2[%c0_4, %c0_5] : memref<4x512xf32, #tpu.memory_space<vmem>>, vector<4x512xf32>
    tpu.vector_store %arg2[%c0_4, %c0_5], %9 {strides = array<i32>} : memref<4x512xf32, #tpu.memory_space<vmem>>, vector<4x512xf32>,
    return
  }
  func.func @transform_0(%arg0: i32) -> (i32, i32) {
    %c0_i32 = arith.constant 0 : i32
    %c0_i32_0 = arith.constant 0 : i32
    return %arg0, %c0_i32 : i32, i32
  }
  func.func @transform_1(%arg0: i32) -> (i32, i32) {
    %c0_i32 = arith.constant 0 : i32
    %c0_i32_0 = arith.constant 0 : i32
    return %arg0, %c0_i32 : i32, i32
  }
}

</mosaic_0001>

<llo_original>
// kernel: tpu_custom_call.1
$region0: #{tpu_custom_call.1}
  #allocation0 [shape = 'u32[]', space=smem, size = 0x4, offset = 0x4, fixed_abs, tag = 'smem constant byte address 0x4 - core index']
  #allocation1 [shape = 'u32[72,128]{1,0:T(1,128)}', space=vmem, size = 0x9000, scoped, tag = 'internal scratch']
  %s0 = inlined_call_operand.hbm [shape: f32[4,512], index: 0, kind: input, shape index: {}]
  %s1 = inlined_call_operand.hbm [shape: f32[4,512], index: 1, kind: output, shape index: {}]
  %s2 = sld [smem:[#allocation0]]
  $region18: #{tpu_custom_call.1} parent=0
    _
  %s4 = ssub.s32 1, %s2
  %s5 = scalar_select 0, %s4, %s2
  $region1: #{tpu_custom_call.1} parent=0
    #allocation2 [shape = 'u8[8192]{0}', space=vmem, size = 0x2000, scoped, tag = 'input window, operand 0, single buffered']
    #allocation3 [shape = 's32[1]{0}', space=sflag, size = 0x4, scoped, tag = 'scoped memory for tpu_custom_call.1']
    #allocation4 [shape = 's32[1]{0}', space=sflag, size = 0x4, scoped, tag = 'scoped memory for tpu_custom_call.1']
    #allocation5 [shape = 'u8[8192]{0}', space=vmem, size = 0x2000, scoped, tag = 'output window, operand 0, single buffered']
    %6 = vsyncpa [#allocation3], 0
    %7 = vsyncpa [#allocation4], 0
    // Predicated region
    $region2: #{tpu_custom_call.1} parent=1 // pred_check
      _
    $region3: #{tpu_custom_call.1} parent=1 // pred_check_branch
      %9 = sbr.rel (0) target = $region5
    $region4: #{tpu_custom_call.1} parent=1 // pred_region
      %11 = vsyncadd [#allocation3], 0
      %s13 = sshll.u32 %s0, 4
      %s14 = int_to_ptr.hbm [resolvable:$true] %s13
      %s15 = sshll.u32 [#allocation2], 4
      %s16 = int_to_ptr.vmem [resolvable:$true] %s15
      %18 = dma.hbm_to_vmem [thread:$0]  %s14, 256, %s16, [#allocation3]
    $region5: #{tpu_custom_call.1} parent=1 // pred_fallthru
      _
    // Predicated region
    $region6: #{tpu_custom_call.1} parent=1 // pred_check
      _
    $region7: #{tpu_custom_call.1} parent=1 // pred_check_branch
      %20 = sbr.rel (0) target = $region9
    $region8: #{tpu_custom_call.1} parent=1 // pred_region
      %22 = dma.done [#allocation3], 256
    $region9: #{tpu_custom_call.1} parent=1 // pred_fallthru
      _
    %v23 = vld [vmem:[#allocation2] sm:$0xff]
    %v24 = vld [vmem:[#allocation2 + $0x8] sm:$0xff]
    %vm25 = vcmp.ge.f32.partialorder %v23, 0.0
    %vm26 = vcmp.ge.f32.partialorder %v24, 0.0
    %v27 = vmul.f32 %v23, 0.1
    %v28 = vmul.f32 %v24, 0.1
    %v29 = vsel %vm25, %v23, %v27
    %v30 = vsel %vm26, %v24, %v28
    %v31 = vsub.f32 %v29, 0.4
    %v32 = vsub.f32 %v30, 0.4
    %v33 = vmin.f32 %v31, 6.0
    %v34 = vmin.f32 %v32, 6.0
    %35 = vst [vmem:[#allocation5] sm:$0xff] %v33
    %36 = vst [vmem:[#allocation5 + $0x8] sm:$0xff] %v34
    // Predicated region
    $region10: #{tpu_custom_call.1} parent=1 // pred_check
      _
    $region11: #{tpu_custom_call.1} parent=1 // pred_check_branch
      %38 = sbr.rel (0) target = $region13
    $region12: #{tpu_custom_call.1} parent=1 // pred_region
      %40 = vsyncadd [#allocation4], 0
      %s42 = sshll.u32 [#allocation5], 4
      %s43 = int_to_ptr.vmem [resolvable:$true] %s42
      %s44 = sshll.u32 %s1, 4
      %s45 = int_to_ptr.hbm [resolvable:$true] %s44
      %47 = dma.vmem_to_hbm [thread:$0]  %s43, 256, %s45, [#allocation4]
    $region13: #{tpu_custom_call.1} parent=1 // pred_fallthru
      _
    // Predicated region
    $region14: #{tpu_custom_call.1} parent=1 // pred_check
      _
    $region15: #{tpu_custom_call.1} parent=1 // pred_check_branch
      %49 = sbr.rel (0) target = $region17
    $region16: #{tpu_custom_call.1} parent=1 // pred_region
      %51 = dma.done [#allocation4], 256
    $region17: #{tpu_custom_call.1} parent=1 // pred_fallthru
      _
    %52 = vsyncpa [#allocation3], 1
    %53 = vsyncpa [#allocation4], 1

</llo_original>
